<compile_context>
chip_gen: v7x
topology: tpu7x:2x2x1
jax: 0.10.0
libtpu: 0.0.40
codegen_flags: <defaults>
</compile_context>

<pallas_src>
import functools

import jax
import jax.numpy as jnp
import numpy as np
from jax.experimental import pallas as pl
from jax.experimental.pallas import tpu as pltpu


def _pow_const(x, gamma):
    """x ** gamma with gamma a Python compile-time constant.

    Small non-negative integer exponents become plain multiplies (VPU only);
    otherwise fall back to jnp.power (EUP exp/log path).
    """
    g = float(gamma)
    if g == int(g) and 0 <= int(g) <= 8:
        n = int(g)
        if n == 0:
            return jnp.ones_like(x)
        out = x
        for _ in range(n - 1):
            out = out * x
        return out
    return jnp.power(x, g)


def _focal_loss_kernel(x_ref, lab_ref, sum_ref, cnt_ref, *, gamma, ignore_lb, num_pixels):
    # x_ref:   (1, C, TP) f32 logits block for batch n, pixel tile (s, p).
    # lab_ref: (1, 1, TP) int32 labels block.
    # sum_ref / cnt_ref: (1, 1, 1) f32 per-(batch, split) accumulators (VMEM-resident
    #                    across the "arbitrary" pixel axis since their index_map is
    #                    constant in p).
    p_id = pl.program_id(2)

    @pl.when(p_id == 0)
    def _():
        sum_ref[...] = jnp.zeros_like(sum_ref)
        cnt_ref[...] = jnp.zeros_like(cnt_ref)

    x = x_ref[0]          # (C, TP) f32
    lab = lab_ref[0]      # (1, TP) int32
    C, tp = x.shape

    # Numerically stable softmax / log-softmax statistics over the class axis.
    m = jnp.max(x, axis=0, keepdims=True)        # (1, TP)
    e = jnp.exp(x - m)                           # (C, TP)   (only exp in the kernel)
    s = jnp.sum(e, axis=0, keepdims=True)        # (1, TP)
    log_s = jnp.log(s)                           # (1, TP)

    # One-hot gather of the logit and its exp at the label class.
    cls = jax.lax.broadcasted_iota(jnp.int32, (C, tp), 0)
    onehot = cls == lab                          # (C, TP) bool
    x_lab = jnp.sum(jnp.where(onehot, x, 0.0), axis=0, keepdims=True)
    e_lab = jnp.sum(jnp.where(onehot, e, 0.0), axis=0, keepdims=True)

    # Approx reciprocal (EUP vrcp) + one Newton step (VPU) -> f32-accurate 1/s.
    inv_s = pl.reciprocal(s, approx=True)
    inv_s = inv_s * (2.0 - s * inv_s)

    score = e_lab * inv_s                        # softmax prob at the label class
    logscore = (x_lab - m) - log_s               # log-softmax at the label class
    factor = _pow_const(jnp.maximum(1.0 - score, 0.0), gamma)
    picked = factor * logscore                   # (1, TP)

    # Mask ignored labels AND lanes beyond the true pixel count (boundary / redundant
    # tiles carry garbage that may alias a valid class id).
    tile = pl.program_id(1) * pl.num_programs(2) + p_id
    lane = jax.lax.broadcasted_iota(jnp.int32, (1, tp), 1)
    in_range = (tile * tp + lane) < num_pixels
    valid = (lab != ignore_lb) & in_range

    contrib = jnp.where(valid, -picked, 0.0)
    sum_ref[0] = sum_ref[0] + jnp.sum(contrib, axis=1, keepdims=True)
    cnt_ref[0] = cnt_ref[0] + jnp.sum(valid.astype(jnp.float32), axis=1, keepdims=True)


def softmax_focal_loss(logits, labels, *, gamma=2.0, ignore_lb=255, max_tp=None):
    """Mean focal NLL loss. logits: (N, C, H, W) f32, labels: (N, H, W) int."""
    N, C, H, W = logits.shape
    assert labels.shape == (N, H, W)
    P = H * W
    LANE = 128

    # Flatten spatial dims to a lane-dense last axis. No HBM padding copy: boundary
    # tiles are masked in-kernel.
    x = logits.reshape(N, C, P).astype(jnp.float32)
    lab = labels.reshape(N, 1, P).astype(jnp.int32)

    # ---- C-aware pixel-tile size from a VMEM byte budget ---------------------------
    try:
        info = pltpu.get_tpu_info()
        vmem_cap = int(getattr(info, "vmem_capacity_bytes", 64 * 1024 * 1024))
    except Exception:
        vmem_cap = 64 * 1024 * 1024
    # Keep the total resident working set well under capacity (v7x: 64 MiB per TC).
    vmem_target = min(vmem_cap // 3, 32 * 1024 * 1024)
    # Approximate resident bytes per pixel lane:
    #   logits block (f32, double-buffered): 8*C     labels block (i32, x2): 8
    #   exp / one-hot intermediates: ~10*C            assorted (1, tp) f32 rows: ~32
    bytes_per_lane = 18 * C + 40
    tp = max(LANE, (vmem_target // bytes_per_lane) // LANE * LANE)
    tp = min(tp, ((P + LANE - 1) // LANE) * LANE)       # never larger than (padded) P
    if max_tp is not None:
        tp = min(tp, max(LANE, (int(max_tp) // LANE) * LANE))

    num_p = -(-P // tp)                                  # pixel tiles actually needed
    # Split the pixel reduction across TensorCores when the batch alone can't (v7x).
    splits = 2 if (N == 1 and num_p >= 2) else 1
    pps = -(-num_p // splits)                            # pixel tiles per split

    if splits == 1:
        pix_map = lambda n, s, p: (n, 0, p)
    else:
        # Clamp redundant trailing tiles onto the last real tile; the kernel's
        # (global_pixel_index < P) mask zeroes their contribution.
        pix_map = lambda n, s, p: (n, 0, jnp.minimum(s * pps + p, num_p - 1))
    out_map = lambda n, s, p: (n * splits + s, 0, 0)

    kernel = functools.partial(_focal_loss_kernel, gamma=gamma,
                               ignore_lb=int(ignore_lb), num_pixels=int(P))

    part_sum, part_cnt = pl.pallas_call(
        kernel,
        out_shape=(jax.ShapeDtypeStruct((N * splits, 1, 1), jnp.float32),
                   jax.ShapeDtypeStruct((N * splits, 1, 1), jnp.float32)),
        grid=(N, splits, pps),
        in_specs=[
            pl.BlockSpec((1, C, tp), pix_map),            # logits tile
            pl.BlockSpec((1, 1, tp), pix_map),            # labels tile
        ],
        out_specs=(
            pl.BlockSpec((1, 1, 1), out_map),             # partial focal-NLL sum
            pl.BlockSpec((1, 1, 1), out_map),             # partial valid-pixel count
        ),
        compiler_params=pltpu.CompilerParams(
            dimension_semantics=("parallel", "parallel", "arbitrary"),
            vmem_limit_bytes=int(min(vmem_cap, 2 * vmem_target))),
    )(x, lab)

    # NaN if there are no valid pixels, matching torch.nn.NLLLoss.
    return jnp.sum(part_sum) / jnp.sum(part_cnt)


def _softmax_focal_loss_ref(logits, labels, gamma, ignore_lb):
    """Pure-JAX reference mirroring the PyTorch module."""
    scores = jax.nn.softmax(logits, axis=1)
    factor = jnp.power(1.0 - scores, gamma)
    log_score = jax.nn.log_softmax(logits, axis=1)
    weighted = factor * log_score
    valid = labels != ignore_lb
    lab_safe = jnp.where(valid, labels, 0)
    gathered = jnp.take_along_axis(weighted, lab_safe[:, None, :, :], axis=1)[:, 0]
    loss_sum = jnp.sum(jnp.where(valid, -gathered, 0.0))
    return loss_sum / jnp.sum(valid).astype(jnp.float32)


if __name__ == "__main__":
    ignore_lb = 255

    # Case 1: batch=2, classes=4, 16x16, integer gamma (focal factor via multiplies).
    k1, k2, k3 = jax.random.split(jax.random.PRNGKey(0), 3)
    N, C, H, W = 2, 4, 16, 16
    gamma = 2.0
    logits = jax.random.normal(k1, (N, C, H, W), dtype=jnp.float32)
    labels = jax.random.randint(k2, (N, H, W), 0, C, dtype=jnp.int32)
    labels = jnp.where(jax.random.uniform(k3, (N, H, W)) < 0.1, ignore_lb, labels)

    loss = jax.block_until_ready(
        softmax_focal_loss(logits, labels, gamma=gamma, ignore_lb=ignore_lb))
    ref = jax.block_until_ready(_softmax_focal_loss_ref(logits, labels, gamma, ignore_lb))
    np.testing.assert_allclose(np.asarray(loss), np.asarray(ref), rtol=1e-5, atol=1e-5)

    # Case 2: batch=1, classes=3, 15x20 (P not a multiple of the tile), fractional
    # gamma, tiny max_tp to force several pixel tiles -> exercises the in-kernel tail
    # mask, the v7x pixel-axis split, and the clamped redundant tile.
    k4, k5, k6 = jax.random.split(jax.random.PRNGKey(0), 3)
    N2, C2, H2, W2 = 1, 3, 15, 20
    gamma2 = 1.5
    logits2 = jax.random.normal(k4, (N2, C2, H2, W2), dtype=jnp.float32)
    labels2 = jax.random.randint(k5, (N2, H2, W2), 0, C2, dtype=jnp.int32)
    labels2 = jnp.where(jax.random.uniform(k6, (N2, H2, W2)) < 0.1, ignore_lb, labels2)

    loss2 = jax.block_until_ready(
        softmax_focal_loss(logits2, labels2, gamma=gamma2, ignore_lb=ignore_lb, max_tp=128))
    ref2 = jax.block_until_ready(
        _softmax_focal_loss_ref(logits2, labels2, gamma2, ignore_lb))
    np.testing.assert_allclose(np.asarray(loss2), np.asarray(ref2), rtol=1e-5, atol=1e-5)

    print("KERNEL_OK")
</pallas_src>

<mosaic_0001>
module attributes {stable_mosaic.version = 11 : i64} {
  func.func @_focal_loss_kernel(%arg0: i32, %arg1: i32, %arg2: i32, %arg3: memref<1x4x256xf32, #tpu.memory_space<vmem>>, %arg4: memref<1x1x256xi32, #tpu.memory_space<vmem>>, %arg5: memref<1x1x1xf32, #tpu.memory_space<vmem>>, %arg6: memref<1x1x1xf32, #tpu.memory_space<vmem>>) attributes {dimension_semantics = [#tpu.dimension_semantics<parallel>, #tpu.dimension_semantics<parallel>, #tpu.dimension_semantics<arbitrary>], iteration_bounds = array<i64: 2, 1, 1>, scalar_prefetch = 0 : i64, scratch_operands = 0 : i64, tpu.core_type = #tpu.core_type<tc>, window_params = [{transform_indices = @transform_0, window_bounds = array<i64: 1, 4, 256>}, {transform_indices = @transform_1, window_bounds = array<i64: 1, 1, 256>}, {transform_indices = @transform_2, window_bounds = array<i64: 1, 1, 1>}, {transform_indices = @transform_3, window_bounds = array<i64: 1, 1, 1>}]} {
    %c0_i32 = arith.constant 0 : i32
    %0 = arith.cmpi eq, %arg2, %c0_i32 : i32
    %1 = arith.extui %0 : i1 to i32
    %c0_i32_0 = arith.constant 0 : i32
    %2 = arith.cmpi ne, %1, %c0_i32_0 : i32
    scf.if %2 {
      %cst_31 = arith.constant 0.000000e+00 : f32
      %73 = vector.broadcast %cst_31 : f32 to vector<1x1x1xf32>
      %c0_32 = arith.constant 0 : index
      %c0_33 = arith.constant 0 : index
      %c0_34 = arith.constant 0 : index
      %74 = vector.load %arg5[%c0_32, %c0_33, %c0_34] : memref<1x1x1xf32, #tpu.memory_space<vmem>>, vector<1x1x1xf32>
      tpu.vector_store %arg5[%c0_32, %c0_33, %c0_34], %73 {strides = array<i32>} : memref<1x1x1xf32, #tpu.memory_space<vmem>>, vector<1x1x1xf32>,
      %cst_35 = arith.constant 0.000000e+00 : f32
      %75 = vector.broadcast %cst_35 : f32 to vector<1x1x1xf32>
      %c0_36 = arith.constant 0 : index
      %c0_37 = arith.constant 0 : index
      %c0_38 = arith.constant 0 : index
      %76 = vector.load %arg6[%c0_36, %c0_37, %c0_38] : memref<1x1x1xf32, #tpu.memory_space<vmem>>, vector<1x1x1xf32>
      tpu.vector_store %arg6[%c0_36, %c0_37, %c0_38], %75 {strides = array<i32>} : memref<1x1x1xf32, #tpu.memory_space<vmem>>, vector<1x1x1xf32>,
    } else {
    }
    %c0 = arith.constant 0 : index
    %c0_1 = arith.constant 0 : index
    %c0_2 = arith.constant 0 : index
    %3 = vector.load %arg3[%c0, %c0_1, %c0_2] : memref<1x4x256xf32, #tpu.memory_space<vmem>>, vector<1x4x256xf32>
    %4 = vector.shape_cast %3 : vector<1x4x256xf32> to vector<4x256xf32>
    %c0_3 = arith.constant 0 : index
    %c0_4 = arith.constant 0 : index
    %c0_5 = arith.constant 0 : index
    %5 = vector.load %arg4[%c0_3, %c0_4, %c0_5] : memref<1x1x256xi32, #tpu.memory_space<vmem>>, vector<1x1x256xi32>
    %6 = vector.shape_cast %5 : vector<1x1x256xi32> to vector<1x256xi32>
    %cst = arith.constant dense<0xFF800000> : vector<256xf32>
    %7 = vector.multi_reduction <maximumf>, %4, %cst [0] : vector<4x256xf32> to vector<256xf32>
    %8 = vector.shape_cast %7 : vector<256xf32> to vector<1x256xf32>
    %9 = vector.broadcast %8 : vector<1x256xf32> to vector<4x256xf32>
    %10 = arith.subf %4, %9 : vector<4x256xf32>
    %11 = math.exp %10 : vector<4x256xf32>
    %cst_6 = arith.constant dense<0.000000e+00> : vector<256xf32>
    %12 = vector.multi_reduction <add>, %11, %cst_6 [0] : vector<4x256xf32> to vector<256xf32>
    %13 = vector.shape_cast %12 : vector<256xf32> to vector<1x256xf32>
    %14 = math.log %13 : vector<1x256xf32>
    %15 = tpu.iota {dimensions = array<i32: 0>} : vector<4x256xi32>
    %16 = vector.broadcast %6 : vector<1x256xi32> to vector<4x256xi32>
    %17 = arith.cmpi eq, %15, %16 : vector<4x256xi32>
    %cst_7 = arith.constant 0.000000e+00 : f32
    %18 = vector.broadcast %cst_7 : f32 to vector<4x256xf32>
    %19 = arith.select %17, %4, %18 : vector<4x256xi1>, vector<4x256xf32>
    %cst_8 = arith.constant dense<0.000000e+00> : vector<256xf32>
    %20 = vector.multi_reduction <add>, %19, %cst_8 [0] : vector<4x256xf32> to vector<256xf32>
    %21 = vector.shape_cast %20 : vector<256xf32> to vector<1x256xf32>
    %cst_9 = arith.constant 0.000000e+00 : f32
    %22 = vector.broadcast %cst_9 : f32 to vector<4x256xf32>
    %23 = arith.select %17, %11, %22 : vector<4x256xi1>, vector<4x256xf32>
    %cst_10 = arith.constant dense<0.000000e+00> : vector<256xf32>
    %24 = vector.multi_reduction <add>, %23, %cst_10 [0] : vector<4x256xf32> to vector<256xf32>
    %25 = vector.shape_cast %24 : vector<256xf32> to vector<1x256xf32>
    %26 = tpu.reciprocal %13 {approx = true} : vector<1x256xf32> -> vector<1x256xf32>
    %27 = arith.mulf %13, %26 : vector<1x256xf32>
    %cst_11 = arith.constant 2.000000e+00 : f32
    %28 = vector.broadcast %cst_11 : f32 to vector<1x256xf32>
    %29 = arith.subf %28, %27 : vector<1x256xf32>
    %30 = arith.mulf %26, %29 : vector<1x256xf32>
    %31 = arith.mulf %25, %30 : vector<1x256xf32>
    %32 = arith.subf %21, %8 : vector<1x256xf32>
    %33 = arith.subf %32, %14 : vector<1x256xf32>
    %cst_12 = arith.constant 1.000000e+00 : f32
    %34 = vector.broadcast %cst_12 : f32 to vector<1x256xf32>
    %35 = arith.subf %34, %31 : vector<1x256xf32>
    %cst_13 = arith.constant 0.000000e+00 : f32
    %36 = vector.broadcast %cst_13 : f32 to vector<1x256xf32>
    %37 = arith.maximumf %35, %36 : vector<1x256xf32>
    %38 = arith.mulf %37, %37 : vector<1x256xf32>
    %39 = arith.mulf %38, %33 : vector<1x256xf32>
    %c1_i32 = arith.constant 1 : i32
    %40 = arith.muli %arg1, %c1_i32 : i32
    %41 = arith.addi %40, %arg2 : i32
    %42 = tpu.iota {dimensions = array<i32: 1>} : vector<1x256xi32>
    %c256_i32 = arith.constant 256 : i32
    %43 = arith.muli %41, %c256_i32 : i32
    %44 = vector.broadcast %43 : i32 to vector<1x256xi32>
    %45 = arith.addi %44, %42 : vector<1x256xi32>
    %c256_i32_14 = arith.constant 256 : i32
    %46 = vector.broadcast %c256_i32_14 : i32 to vector<1x256xi32>
    %47 = arith.cmpi slt, %45, %46 : vector<1x256xi32>
    %c255_i32 = arith.constant 255 : i32
    %48 = vector.broadcast %c255_i32 : i32 to vector<1x256xi32>
    %49 = arith.cmpi ne, %6, %48 : vector<1x256xi32>
    %50 = arith.andi %49, %47 : vector<1x256xi1>
    %cst_15 = arith.constant 0.000000e+00 : f32
    %51 = vector.broadcast %cst_15 : f32 to vector<1x256xf32>
    %52 = arith.subf %51, %39 : vector<1x256xf32>
    %cst_16 = arith.constant 0.000000e+00 : f32
    %53 = vector.broadcast %cst_16 : f32 to vector<1x256xf32>
    %54 = arith.select %50, %52, %53 : vector<1x256xi1>, vector<1x256xf32>
    %c0_17 = arith.constant 0 : index
    %c0_18 = arith.constant 0 : index
    %c0_19 = arith.constant 0 : index
    %55 = vector.load %arg5[%c0_17, %c0_18, %c0_19] : memref<1x1x1xf32, #tpu.memory_space<vmem>>, vector<1x1x1xf32>
    %56 = vector.shape_cast %55 : vector<1x1x1xf32> to vector<1x1xf32>
    %cst_20 = arith.constant dense<0.000000e+00> : vector<1xf32>
    %57 = vector.multi_reduction <add>, %54, %cst_20 [1] : vector<1x256xf32> to vector<1xf32>
    %58 = vector.shape_cast %57 : vector<1xf32> to vector<1x1xf32>
    %59 = arith.addf %56, %58 : vector<1x1xf32>
    %c0_21 = arith.constant 0 : index
    %c0_22 = arith.constant 0 : index
    %c0_23 = arith.constant 0 : index
    %60 = vector.load %arg5[%c0_21, %c0_22, %c0_23] : memref<1x1x1xf32, #tpu.memory_space<vmem>>, vector<1x1x1xf32>
    %61 = vector.shape_cast %60 : vector<1x1x1xf32> to vector<1x1xf32>
    %62 = vector.shape_cast %59 : vector<1x1xf32> to vector<1x1x1xf32>
    tpu.vector_store %arg5[%c0_21, %c0_22, %c0_23], %62 {strides = array<i32>} : memref<1x1x1xf32, #tpu.memory_space<vmem>>, vector<1x1x1xf32>,
    %c0_24 = arith.constant 0 : index
    %c0_25 = arith.constant 0 : index
    %c0_26 = arith.constant 0 : index
    %63 = vector.load %arg6[%c0_24, %c0_25, %c0_26] : memref<1x1x1xf32, #tpu.memory_space<vmem>>, vector<1x1x1xf32>
    %64 = vector.shape_cast %63 : vector<1x1x1xf32> to vector<1x1xf32>
    %65 = arith.extui %50 : vector<1x256xi1> to vector<1x256xi32>
    %66 = arith.sitofp %65 : vector<1x256xi32> to vector<1x256xf32>
    %cst_27 = arith.constant dense<0.000000e+00> : vector<1xf32>
    %67 = vector.multi_reduction <add>, %66, %cst_27 [1] : vector<1x256xf32> to vector<1xf32>
    %68 = vector.shape_cast %67 : vector<1xf32> to vector<1x1xf32>
    %69 = arith.addf %64, %68 : vector<1x1xf32>
    %c0_28 = arith.constant 0 : index
    %c0_29 = arith.constant 0 : index
    %c0_30 = arith.constant 0 : index
    %70 = vector.load %arg6[%c0_28, %c0_29, %c0_30] : memref<1x1x1xf32, #tpu.memory_space<vmem>>, vector<1x1x1xf32>
    %71 = vector.shape_cast %70 : vector<1x1x1xf32> to vector<1x1xf32>
    %72 = vector.shape_cast %69 : vector<1x1xf32> to vector<1x1x1xf32>
    tpu.vector_store %arg6[%c0_28, %c0_29, %c0_30], %72 {strides = array<i32>} : memref<1x1x1xf32, #tpu.memory_space<vmem>>, vector<1x1x1xf32>,
    return
  }
  func.func @transform_0(%arg0: i32, %arg1: i32, %arg2: i32) -> (i32, i32, i32) {
    %c0_i32 = arith.constant 0 : i32
    %c0_i32_0 = arith.constant 0 : i32
    return %arg0, %c0_i32, %arg2 : i32, i32, i32
  }
  func.func @transform_1(%arg0: i32, %arg1: i32, %arg2: i32) -> (i32, i32, i32) {
    %c0_i32 = arith.constant 0 : i32
    %c0_i32_0 = arith.constant 0 : i32
    return %arg0, %c0_i32, %arg2 : i32, i32, i32
  }
  func.func @transform_2(%arg0: i32, %arg1: i32, %arg2: i32) -> (i32, i32, i32) {
    %c1_i32 = arith.constant 1 : i32
    %0 = arith.muli %arg0, %c1_i32 : i32
    %1 = arith.addi %0, %arg1 : i32
    %c0_i32 = arith.constant 0 : i32
    %c0_i32_0 = arith.constant 0 : i32
    %c0_i32_1 = arith.constant 0 : i32
    return %1, %c0_i32, %c0_i32_0 : i32, i32, i32
  }
  func.func @transform_3(%arg0: i32, %arg1: i32, %arg2: i32) -> (i32, i32, i32) {
    %c1_i32 = arith.constant 1 : i32
    %0 = arith.muli %arg0, %c1_i32 : i32
    %1 = arith.addi %0, %arg1 : i32
    %c0_i32 = arith.constant 0 : i32
    %c0_i32_0 = arith.constant 0 : i32
    %c0_i32_1 = arith.constant 0 : i32
    return %1, %c0_i32, %c0_i32_0 : i32, i32, i32
  }
}

</mosaic_0001>

<llo_original>
// kernel: tpu_custom_call.1
$region0: #{tpu_custom_call.1}
  #allocation0 [shape = 'u32[]', space=smem, size = 0x4, offset = 0x4, fixed_abs, tag = 'smem constant byte address 0x4 - core index']
  #allocation1 [shape = 'u32[144,128]{1,0:T(1,128)}', space=vmem, size = 0x12000, scoped, tag = 'internal scratch']
  %s0 = inlined_call_operand.hbm [shape: f32[2,4,256], index: 0, kind: input, shape index: {}]
  %s1 = inlined_call_operand.hbm [shape: s32[2,1,256], index: 1, kind: input, shape index: {}]
  %s2 = inlined_call_operand.vmem [shape: f32[2,1,1], index: 2, kind: output, shape index: {0}]
  %s3 = inlined_call_operand.vmem [shape: f32[2,1,1], index: 3, kind: output, shape index: {1}]
  %4 = xla_tuple %s2, %s3
  %s5 = sld [smem:[#allocation0]]
  $region61: #{tpu_custom_call.1} parent=0
    _
  %s7 = ssub.s32 1, %s5
  %s8 = scalar_select 0, %s7, %s5
  $region1: #{tpu_custom_call.1} parent=0
    #allocation2 [shape = 'u8[8192]{0}', space=vmem, size = 0x2000, scoped, tag = 'input window, operand 0']
    #allocation3 [shape = 's32[2]{0}', space=sflag, size = 0x8, scoped, tag = 'scoped memory for tpu_custom_call.1']
    #allocation4 [shape = 'u8[2048]{0}', space=vmem, size = 0x800, scoped, tag = 'input window, operand 1']
    #allocation5 [shape = 's32[2]{0}', space=sflag, size = 0x8, scoped, tag = 'scoped memory for tpu_custom_call.1']
    %9 = vsyncpa [#allocation3], 0
    %s10 = scalar_lea.sflag [#allocation3], 1
    %11 = vsyncpa %s10, 0
    %12 = vsyncpa [#allocation5], 0
    %s13 = scalar_lea.sflag [#allocation5], 1
    %14 = vsyncpa %s13, 0
    loop: start=0, step=1, limit=4
    $region2: #{tpu_custom_call.1} parent=1 // loop_pre_header
      _
    $region3: #{tpu_custom_call.1} parent=1 // loop_header
      %s16 = sphi 0, %s20
      %p17 = scmp.ge.s32.totalorder %s16, 4
      %s23 = sphi 0, %s42
      %s24 = sphi 0, %s38
      %s25 = sphi 0, %s34
      %s26 = sphi 0, %s23
      %s27 = sphi 0, %s24
      %s28 = sphi 0, %s25
      %s29 = sphi 0, %s26
      %s30 = sphi 0, %s27
      %s31 = sphi 0, %s28
      %s47 = sphi 0, %s49
      %s50 = sphi 0, %s47
      %s51 = sphi 0, %s50
      %s67 = sphi 0, %s51
      %s75 = sphi 0, %s77
      %s78 = sphi 0, %s75
      %s79 = sphi 0, %s78
      %s95 = sphi 0, %s79
      %s103 = sphi 0, %s105
      %s106 = sphi 0, %s103
      %s107 = sphi 0, %s106
      %s123 = sphi 0, %s107
      %s131 = sphi 0, %s133
      %s134 = sphi 0, %s131
      %s135 = sphi 0, %s134
      %s151 = sphi 0, %s135
    $region4: #{tpu_custom_call.1} parent=1 // loop_header_branch
      %19 = sbr.rel (%p17) target = $region8
    $region5: #{tpu_custom_call.1} parent=1 // loop_body
      %s21 = ssub.s32 %s16, 1
      %s22 = ssub.s32 %s16, 2
      %s32 = sadd.s32 1, %s25
      %p33 = scmp.ge.s32.totalorder %s32, 1
      %s34 = scalar_select %p33, 0, %s32
      %s35 = sadd.s32 1, %s24
      %s36 = scalar_select %p33, %s35, %s24
      %p37 = scmp.ge.s32.totalorder %s36, 1
      %s38 = scalar_select %p37, 0, %s36
      %s39 = sadd.s32 1, %s23
      %s40 = scalar_select %p37, %s39, %s23
      %p41 = scmp.ge.s32.totalorder %s40, 2
      %s42 = scalar_select %p41, 0, %s40
      %s43 = ssub.s32 %s23, %s42
      %s44 = ssub.s32 %s25, %s34
      %s45 = sor.u32 %s43, %s44
      %p46 = scmp.eq.s32.totalorder %s45, 0
      %s48 = sadd.s32 %s47, 1
      %s49 = scalar_select %p46, %s47, %s48
      %p52 = pneg %p46
      %p53 = scmp.eq.s32.totalorder %s16, 1
      %p54 = por %p52, %p53
      %p55 = scmp.ne.s32.totalorder %s47, %s50
      %p56 = scmp.eq.s32.totalorder %s16, 0
      %p57 = por %p55, %p56
      %p58 = scmp.ne.s32.totalorder %s47, %s50
      %p59 = scmp.eq.s32.totalorder %s21, 1
      %p60 = por %p58, %p59
      %p61 = scmp.ne.s32.totalorder %s50, %s51
      %p62 = scmp.eq.s32.totalorder %s21, 0
      %p63 = por %p61, %p62
      %p64 = scmp.ne.s32.totalorder %s50, %s51
      %p65 = scmp.eq.s32.totalorder %s22, 1
      %p66 = por %p64, %p65
      %p68 = scmp.ne.s32.totalorder %s51, %s67
      %p69 = scmp.eq.s32.totalorder %s22, 0
      %p70 = por %p68, %p69
      %s71 = ssub.s32 %s23, %s42
      %s72 = ssub.s32 %s25, %s34
      %s73 = sor.u32 %s71, %s72
      %p74 = scmp.eq.s32.totalorder %s73, 0
      %s76 = sadd.s32 %s75, 1
      %s77 = scalar_select %p74, %s75, %s76
      %p80 = pneg %p74
      %p81 = scmp.eq.s32.totalorder %s16, 1
      %p82 = por %p80, %p81
      %p83 = scmp.ne.s32.totalorder %s75, %s78
      %p84 = scmp.eq.s32.totalorder %s16, 0
      %p85 = por %p83, %p84
      %p86 = scmp.ne.s32.totalorder %s75, %s78
      %p87 = scmp.eq.s32.totalorder %s21, 1
      %p88 = por %p86, %p87
      %p89 = scmp.ne.s32.totalorder %s78, %s79
      %p90 = scmp.eq.s32.totalorder %s21, 0
      %p91 = por %p89, %p90
      %p92 = scmp.ne.s32.totalorder %s78, %s79
      %p93 = scmp.eq.s32.totalorder %s22, 1
      %p94 = por %p92, %p93
      %p96 = scmp.ne.s32.totalorder %s79, %s95
      %p97 = scmp.eq.s32.totalorder %s22, 0
      %p98 = por %p96, %p97
      %s99 = sadd.s32 %s23, %s24
      %s100 = sadd.s32 %s42, %s38
      %s101 = ssub.s32 %s99, %s100
      %p102 = scmp.eq.s32.totalorder %s101, 0
      %s104 = sadd.s32 %s103, 1
      %s105 = scalar_select %p102, %s103, %s104
      %p108 = pneg %p102
      %p109 = scmp.eq.s32.totalorder %s16, 1
      %p110 = por %p108, %p109
      %p111 = scmp.ne.s32.totalorder %s103, %s106
      %p112 = scmp.eq.s32.totalorder %s16, 0
      %p113 = por %p111, %p112
      %p114 = scmp.ne.s32.totalorder %s103, %s106
      %p115 = scmp.eq.s32.totalorder %s21, 1
      %p116 = por %p114, %p115
      %p117 = scmp.ne.s32.totalorder %s106, %s107
      %p118 = scmp.eq.s32.totalorder %s21, 0
      %p119 = por %p117, %p118
      %p120 = scmp.ne.s32.totalorder %s106, %s107
      %p121 = scmp.eq.s32.totalorder %s22, 1
      %p122 = por %p120, %p121
      %p124 = scmp.ne.s32.totalorder %s107, %s123
      %p125 = scmp.eq.s32.totalorder %s22, 0
      %p126 = por %p124, %p125
      %s127 = sadd.s32 %s23, %s24
      %s128 = sadd.s32 %s42, %s38
      %s129 = ssub.s32 %s127, %s128
      %p130 = scmp.eq.s32.totalorder %s129, 0
      %s132 = sadd.s32 %s131, 1
      %s133 = scalar_select %p130, %s131, %s132
      %p136 = pneg %p130
      %p137 = scmp.eq.s32.totalorder %s16, 1
      %p138 = por %p136, %p137
      %p139 = scmp.ne.s32.totalorder %s131, %s134
      %p140 = scmp.eq.s32.totalorder %s16, 0
      %p141 = por %p139, %p140
      %p142 = scmp.ne.s32.totalorder %s131, %s134
      %p143 = scmp.eq.s32.totalorder %s21, 1
      %p144 = por %p142, %p143
      %p145 = scmp.ne.s32.totalorder %s134, %s135
      %p146 = scmp.eq.s32.totalorder %s21, 0
      %p147 = por %p145, %p146
      %p148 = scmp.ne.s32.totalorder %s134, %s135
      %p149 = scmp.eq.s32.totalorder %s22, 1
      %p150 = por %p148, %p149
      %p152 = scmp.ne.s32.totalorder %s135, %s151
      %p153 = scmp.eq.s32.totalorder %s22, 0
      %p154 = por %p152, %p153
      %p155 = scmp.le.s32.totalorder 1, %s16
      %p156 = scmp.lt.s32.totalorder %s16, 3
      %p157 = pnand %p155, %p156
      %p158 = pneg %p157
      // Predicated region
      $region9: #{tpu_custom_call.1} parent=5 // pred_check
        _
      $region10: #{tpu_custom_call.1} parent=5 // pred_check_branch
        %160 = sbr.rel (%p157) target = $region12
      $region11: #{tpu_custom_call.1} parent=5 // pred_region
        %s161 = ssub.s32 %s16, 1
      $region12: #{tpu_custom_call.1} parent=5 // pred_fallthru
        _
      %p162 = scmp.lt.s32.totalorder %s16, 2
      // Predicated region
      $region13: #{tpu_custom_call.1} parent=5 // pred_check
        %p163 = pneg %p162
      $region14: #{tpu_custom_call.1} parent=5 // pred_check_branch
        %165 = sbr.rel (%p163) target = $region16
      $region15: #{tpu_custom_call.1} parent=5 // pred_region
        // Predicated region
        $region17: #{tpu_custom_call.1} parent=15 // pred_check
          %p166 = pneg %p57
        $region18: #{tpu_custom_call.1} parent=15 // pred_check_branch
          %168 = sbr.rel (%p166) target = $region20
        $region19: #{tpu_custom_call.1} parent=15 // pred_region
          %s169 = sand.u32 %s47, 1
          %s170 = scalar_lea.sflag [#allocation3], %s169
          %s171 = sand.u32 %s47, 1
          %s172 = smul.addr %s171, 8
          %s173 = scalar_lea.vmem [#allocation2], %s172
          %s174 = smul.u32 2, %s25
          %s176 = ssub.s32 128, 128
          %177 = vsyncadd %s170, %s176
          %s178 = smul.addr %s23, 2
          %s179 = sadd.s32 %s174, %s178
          %s180 = smul.addr %s179, 64
          %s181 = scalar_lea.hbm %s0, %s180
          %s183 = sshll.u32 %s173, 4
          %s184 = int_to_ptr.vmem [resolvable:$true] %s183
          %186 = dma.hbm_to_vmem [thread:$0]  %s181, 128, %s184, %s170
        $region20: #{tpu_custom_call.1} parent=15 // pred_fallthru
          _
        // Predicated region
        $region21: #{tpu_custom_call.1} parent=15 // pred_check
          %p187 = pneg %p85
        $region22: #{tpu_custom_call.1} parent=15 // pred_check_branch
          %189 = sbr.rel (%p187) target = $region24
        $region23: #{tpu_custom_call.1} parent=15 // pred_region
          %s190 = sand.u32 %s75, 1
          %s191 = scalar_lea.sflag [#allocation5], %s190
          %s192 = sand.u32 %s75, 1
          %s193 = smul.addr %s192, 2
          %s194 = scalar_lea.vmem [#allocation4], %s193
          %s195 = smul.u32 2, %s25
          %s197 = ssub.s32 32, 32
          %198 = vsyncadd %s191, %s197
          %s199 = smul.addr %s23, 2
          %s200 = sadd.s32 %s195, %s199
          %s201 = smul.addr %s200, 16
          %s202 = scalar_lea.hbm %s1, %s201
          %s204 = sshll.u32 %s194, 4
          %s205 = int_to_ptr.vmem [resolvable:$true] %s204
          %207 = dma.hbm_to_vmem [thread:$0]  %s202, 32, %s205, %s191
        $region24: #{tpu_custom_call.1} parent=15 // pred_fallthru
          _
      $region16: #{tpu_custom_call.1} parent=5 // pred_fallthru
        _
      %p208 = scmp.le.s32.totalorder 1, %s16
      %p209 = scmp.lt.s32.totalorder %s16, 3
      %p210 = pnand %p208, %p209
      %p211 = pneg %p210
      // Predicated region
      $region25: #{tpu_custom_call.1} parent=5 // pred_check
        _
      $region26: #{tpu_custom_call.1} parent=5 // pred_check_branch
        %213 = sbr.rel (%p210) target = $region28
      $region27: #{tpu_custom_call.1} parent=5 // pred_region
        %s214 = ssub.s32 %s16, 1
        %s215 = sand.u32 %s50, 1
        %s216 = scalar_lea.sflag [#allocation3], %s215
        %s217 = sand.u32 %s50, 1
        %s218 = smul.addr %s217, 8
        %s219 = scalar_lea.vmem [#allocation2], %s218
        // Predicated region
        $region29: #{tpu_custom_call.1} parent=27 // pred_check
          %p220 = pneg %p63
        $region30: #{tpu_custom_call.1} parent=27 // pred_check_branch
          %222 = sbr.rel (%p220) target = $region32
        $region31: #{tpu_custom_call.1} parent=27 // pred_region
          %223 = dma.done %s216, 128
        $region32: #{tpu_custom_call.1} parent=27 // pred_fallthru
          _
        %s224 = sand.u32 %s78, 1
        %s225 = scalar_lea.sflag [#allocation5], %s224
        %s226 = sand.u32 %s78, 1
        %s227 = smul.addr %s226, 2
        %s228 = scalar_lea.vmem [#allocation4], %s227
        // Predicated region
        $region33: #{tpu_custom_call.1} parent=27 // pred_check
          %p229 = pneg %p91
        $region34: #{tpu_custom_call.1} parent=27 // pred_check_branch
          %231 = sbr.rel (%p229) target = $region36
        $region35: #{tpu_custom_call.1} parent=27 // pred_region
          %232 = dma.done %s225, 32
        $region36: #{tpu_custom_call.1} parent=27 // pred_fallthru
          _
        %s233 = sand.u32 %s50, 1
        %s234 = scalar_lea.sflag [#allocation3], %s233
        %s235 = sand.u32 %s50, 1
        %s236 = smul.addr %s235, 8
        %s237 = scalar_lea.vmem [#allocation2], %s236
        %p238 = pneg %p63
        %p239 = pneg %p60
        %s240 = sand.u32 %s78, 1
        %s241 = scalar_lea.sflag [#allocation5], %s240
        %s242 = sand.u32 %s78, 1
        %s243 = smul.addr %s242, 2
        %s244 = scalar_lea.vmem [#allocation4], %s243
        %p245 = pneg %p91
        %p246 = pneg %p88
        %p247 = pneg %p119
        %p248 = pneg %p116
        %s249 = sadd.s32 %s26, %s27
        %p250 = scmp.lt.s32.totalorder %s249, 1
        %s251 = scalar_select %p250, %s249, 1
        %s252 = scalar_lea.vmem %s2, %s251
        %p253 = pneg %p147
        %p254 = pneg %p144
        %s255 = sadd.s32 %s26, %s27
        %p256 = scmp.lt.s32.totalorder %s255, 1
        %s257 = scalar_select %p256, %s255, 1
        %s258 = scalar_lea.vmem %s3, %s257
        %s259 = smul.u32 2, %s28
        %s260 = smul.u32 2, %s28
        %s261 = sadd.s32 %s26, %s27
        %p262 = scmp.lt.s32.totalorder %s261, 1
        %s263 = scalar_select %p262, %s261, 1
        %s264 = scalar_lea.vmem %s2, %s263
        %s265 = sadd.s32 %s26, %s27
        %s266 = sadd.s32 %s26, %s27
        %p267 = scmp.lt.s32.totalorder %s266, 1
        %s268 = scalar_select %p267, %s266, 1
        %s269 = scalar_lea.vmem %s3, %s268
        %s270 = sadd.s32 %s26, %s27
        %p271 = scmp.eq.s32.totalorder %s28, 0
        // Predicated region
        $region37: #{tpu_custom_call.1} parent=27 // pred_check
          %p272 = pneg %p271
        $region38: #{tpu_custom_call.1} parent=27 // pred_check_branch
          %274 = sbr.rel (%p272) target = $region40
        $region39: #{tpu_custom_call.1} parent=27 // pred_region
          %vm275 = vcmask 0
          %276 = vst.msk [vmem:[%s264] sm:$0x1] %vm275, 0.0
          %277 = vst.msk [vmem:[%s269] sm:$0x1] %vm275, 0.0
        $region40: #{tpu_custom_call.1} parent=27 // pred_fallthru
          _
        %v278 = vld [vmem:[%s219] sm:$0xff]
        %v279 = vld [vmem:[%s228] sm:$0x3]
        %v281 = vcombine.high %v278, %v278
        %vm283 = vcmask 1043456
        %v284 = vsel %vm283, %v278, -inf
        %v285 = vrot.slane %v284, 4
        %v286 = vmax.f32 %v284, %v285
        %v287 = vrot.slane %v286, 2
        %v288 = vmax.f32 %v286, %v287
        %v289 = vrot.slane %v288, 1
        %v290 = vmax.f32 %v288, %v289
        %v291 = vsel %vm283, %v281, -inf
        %v292 = vrot.slane %v291, 4
        %v293 = vmax.f32 %v291, %v292
        %v294 = vrot.slane %v293, 2
        %v295 = vmax.f32 %v293, %v294
        %v296 = vrot.slane %v295, 1
        %v297 = vmax.f32 %v295, %v296
        %v300 = vcombine.low %v290, %v297
        %v302 = vsub.f32 %v278, %v300
        %v303 = vmul.f32 %v302, 1.442695
        %v304 = vpow.pop %v303
        %v306 = vcombine.high %v304, %v304
        %v308 = vsel %vm283, %v304, 0.0
        %v309 = vrot.slane %v308, 4
        %v310 = vadd.f32 %v308, %v309
        %v311 = vrot.slane %v310, 2
        %v312 = vadd.f32 %v310, %v311
        %v313 = vrot.slane %v312, 1
        %v314 = vadd.f32 %v312, %v313
        %v315 = vsel %vm283, %v306, 0.0
        %v316 = vrot.slane %v315, 4
        %v317 = vadd.f32 %v315, %v316
        %v318 = vrot.slane %v317, 2
        %v319 = vadd.f32 %v317, %v318
        %v320 = vrot.slane %v319, 1
        %v321 = vadd.f32 %v319, %v320
        %v322 = vlog2.pop %v314
        %v323 = vmul.f32 %v322, 0.6931472
        %v324 = vlog2.pop %v321
        %v325 = vmul.f32 %v324, 0.6931472
        %v326 = vlaneseq
        %v327 = vshrl.u32 %v326, 7
        %v328 = vlaneseq
        %v329 = vshrl.u32 %v328, 7
        %v330 = vsub.s32 0, %v329
        %v331 = vrot.slane %v279, %v330
        %v332 = vlaneseq
        %v333 = vshrl.u32 %v332, 7
        %v334 = vsub.s32 1, %v333
        %v335 = vrot.slane %v279, %v334
        %vm336 = vcmp.eq.s32.totalorder %v327, %v331
        %vm337 = vcmp.eq.s32.totalorder %v327, %v335
        %v338 = vsel %vm336, %v278, 0.0
        %v339 = vsel %vm337, %v281, 0.0
        %v340 = vsel %vm283, %v338, 0.0
        %v341 = vrot.slane %v340, 4
        %v342 = vadd.f32 %v340, %v341
        %v343 = vrot.slane %v342, 2
        %v344 = vadd.f32 %v342, %v343
        %v345 = vrot.slane %v344, 1
        %v346 = vadd.f32 %v344, %v345
        %v347 = vsel %vm283, %v339, 0.0
        %v348 = vrot.slane %v347, 4
        %v349 = vadd.f32 %v347, %v348
        %v350 = vrot.slane %v349, 2
        %v351 = vadd.f32 %v349, %v350
        %v352 = vrot.slane %v351, 1
        %v353 = vadd.f32 %v351, %v352
        %v354 = vsel %vm336, %v304, 0.0
        %v355 = vsel %vm337, %v306, 0.0
        %v356 = vsel %vm283, %v354, 0.0
        %v357 = vrot.slane %v356, 4
        %v358 = vadd.f32 %v356, %v357
        %v359 = vrot.slane %v358, 2
        %v360 = vadd.f32 %v358, %v359
        %v361 = vrot.slane %v360, 1
        %v362 = vadd.f32 %v360, %v361
        %v363 = vsel %vm283, %v355, 0.0
        %v364 = vrot.slane %v363, 4
        %v365 = vadd.f32 %v363, %v364
        %v366 = vrot.slane %v365, 2
        %v367 = vadd.f32 %v365, %v366
        %v368 = vrot.slane %v367, 1
        %v369 = vadd.f32 %v367, %v368
        %v370 = vrcp.pop %v314
        %v371 = vrcp.pop %v321
        %v372 = vmul.f32 %v314, %v370
        %v373 = vmul.f32 %v321, %v371
        %v374 = vsub.f32 2.0, %v372
        %v375 = vsub.f32 2.0, %v373
        %v376 = vmul.f32 %v370, %v374
        %v377 = vmul.f32 %v371, %v375
        %v378 = vmul.f32 %v362, %v376
        %v379 = vmul.f32 %v369, %v377
        %v380 = vsub.f32 %v346, %v290
        %v381 = vsub.f32 %v353, %v297
        %v382 = vsub.f32 %v380, %v323
        %v383 = vsub.f32 %v381, %v325
        %v384 = vsub.f32 1.0, %v378
        %v385 = vsub.f32 1.0, %v379
        %v386 = vmax.f32 %v384, 0.0
        %v387 = vmax.f32 %v385, 0.0
        %v388 = vmul.f32 %v386, %v386
        %v389 = vmul.f32 %v387, %v387
        %v390 = vmul.f32 %v388, %v382
        %v391 = vmul.f32 %v389, %v383
        %s392 = sadd.s32 %s27, %s28
        %v393 = vlaneseq
        %v394 = vand.u32 %v393, 127
        %v395 = vadd.s32 %v394, 128
        %s396 = smul.u32 %s392, 256
        %v397 = vstv %s396
        %v398 = vadd.s32 %v397, %v394
        %v399 = vadd.s32 %v397, %v395
        %vm400 = vcmp.lt.s32.totalorder %v398, 256
        %vm401 = vcmp.lt.s32.totalorder %v399, 256
        %vm402 = vcmp.ne.s32.totalorder %v279, 255
        %v403 = vsel %vm400, 1, 0
        %v404 = vsel %vm401, 1, 0
        %v405 = vcombine.low %v403, %v404
        %v407 = vunpack.c.l.s4 1966171168
        %v408 = vunpack.c.0.s8 %v407
        %v409 = vlaneseq
        %v410 = vshrl.u32 %v409, 7
        %v411 = vsub.s32 %v408, %v410
        %v412 = vrot.slane %v405, %v411
        %v414 = vunpack.c.l.s4 1966171168
        %v415 = vunpack.c.0.s8 %v414
        %v416 = vlaneseq
        %v417 = vshrl.u32 %v416, 7
        %v418 = vsub.s32 %v415, %v417
        %v419 = vrot.slane %v412, %v418
        %vm420 = vcmp.ne.s32.totalorder %v419, 0
        %vm421 = vmand %vm402, %vm420
        %v422 = vsub.f32 0.0, %v390
        %v423 = vsub.f32 0.0, %v391
        %v426 = vcombine.low %v422, %v423
        %v428 = vunpack.c.l.s4 1966171168
        %v429 = vunpack.c.0.s8 %v428
        %v430 = vlaneseq
        %v431 = vshrl.u32 %v430, 7
        %v432 = vsub.s32 %v429, %v431
        %v433 = vrot.slane %v426, %v432
        %v435 = vunpack.c.l.s4 1966171168
        %v436 = vunpack.c.0.s8 %v435
        %v437 = vlaneseq
        %v438 = vshrl.u32 %v437, 7
        %v439 = vsub.s32 %v436, %v438
        %v440 = vrot.slane %v433, %v439
        %v442 = vsel %vm421, %v440, 0.0
        %v443 = vld [vmem:[%s264] sm:$0x1]
        %v445 = vlaneseq
        %v446 = vshrl.u32 %v445, 7
        %v447 = vsub.s32 0, %v446
        %v448 = vrot.slane %v442, %v447
        %v449 = vlaneseq
        %v450 = vshrl.u32 %v449, 7
        %v451 = vsub.s32 1, %v450
        %v452 = vrot.slane %v442, %v451
        %vm455 = vcmask 1040384
        %v456 = vsel %vm455, %v448, 0.0
        %v457 = vsel %vm455, %v452, 0.0
        %v458 = vadd.f32 %v456, %v457
        %459 = vadd.xlane.f32.xlu0 %v458
        %v460 = vpop.xlane.xlu0 %459
        %v461 = vadd.f32 %v443, %v460
        %vm462 = vcmask 0
        %463 = vst.msk [vmem:[%s264] sm:$0x1] %vm462, %v461
        %v464 = vld [vmem:[%s269] sm:$0x1]
        %v465 = vsel %vm421, 1, 0
        %v466 = vcvt.s32.f32 %v465
        %v468 = vlaneseq
        %v469 = vshrl.u32 %v468, 7
        %v470 = vsub.s32 0, %v469
        %v471 = vrot.slane %v466, %v470
        %v472 = vlaneseq
        %v473 = vshrl.u32 %v472, 7
        %v474 = vsub.s32 1, %v473
        %v475 = vrot.slane %v466, %v474
        %v478 = vsel %vm455, %v471, 0.0
        %v479 = vsel %vm455, %v475, 0.0
        %v480 = vadd.f32 %v478, %v479
        %481 = vadd.xlane.f32.xlu0 %v480
        %v482 = vpop.xlane.xlu0 %481
        %v483 = vadd.f32 %v464, %v482
        %484 = vst.msk [vmem:[%s269] sm:$0x1] %vm462, %v483
        %s485 = sadd.s32 %s26, %s27
        %p486 = scmp.lt.s32.totalorder %s485, 1
        %s487 = scalar_select %p486, %s485, 1
        %s488 = scalar_lea.vmem %s2, %s487
        %s489 = sadd.s32 %s26, %s27
        %p490 = scmp.lt.s32.totalorder %s489, 1
        %s491 = scalar_select %p490, %s489, 1
        %s492 = scalar_lea.vmem %s3, %s491
        // Predicated region
        $region41: #{tpu_custom_call.1} parent=27 // pred_check
          %p493 = pneg %p116
        $region42: #{tpu_custom_call.1} parent=27 // pred_check_branch
          %495 = sbr.rel (%p493) target = $region44
        $region43: #{tpu_custom_call.1} parent=27 // pred_region
          %s496 = sadd.s32 %s26, %s27
        $region44: #{tpu_custom_call.1} parent=27 // pred_fallthru
          _
        // Predicated region
        $region45: #{tpu_custom_call.1} parent=27 // pred_check
          %p497 = pneg %p144
        $region46: #{tpu_custom_call.1} parent=27 // pred_check_branch
          %499 = sbr.rel (%p497) target = $region48
        $region47: #{tpu_custom_call.1} parent=27 // pred_region
          %s500 = sadd.s32 %s26, %s27
        $region48: #{tpu_custom_call.1} parent=27 // pred_fallthru
          _
      $region28: #{tpu_custom_call.1} parent=5 // pred_fallthru
        _
      %p501 = scmp.le.s32.totalorder 2, %s16
      // Predicated region
      $region49: #{tpu_custom_call.1} parent=5 // pred_check
        %p502 = pneg %p501
      $region50: #{tpu_custom_call.1} parent=5 // pred_check_branch
        %504 = sbr.rel (%p502) target = $region52
      $region51: #{tpu_custom_call.1} parent=5 // pred_region
        %s505 = ssub.s32 %s16, 2
        // Predicated region
        $region53: #{tpu_custom_call.1} parent=51 // pred_check
          %p506 = pneg %p122
        $region54: #{tpu_custom_call.1} parent=51 // pred_check_branch
          %508 = sbr.rel (%p506) target = $region56
        $region55: #{tpu_custom_call.1} parent=51 // pred_region
          %s509 = sadd.s32 %s29, %s30
          %p510 = scmp.lt.s32.totalorder %s509, 1
          %s511 = scalar_select %p510, %s509, 1
          %s512 = scalar_lea.vmem %s2, %s511
        $region56: #{tpu_custom_call.1} parent=51 // pred_fallthru
          _
        // Predicated region
        $region57: #{tpu_custom_call.1} parent=51 // pred_check
          %p513 = pneg %p150
        $region58: #{tpu_custom_call.1} parent=51 // pred_check_branch
          %515 = sbr.rel (%p513) target = $region60
        $region59: #{tpu_custom_call.1} parent=51 // pred_region
          %s516 = sadd.s32 %s29, %s30
          %p517 = scmp.lt.s32.totalorder %s516, 1
          %s518 = scalar_select %p517, %s516, 1
          %s519 = scalar_lea.vmem %s3, %s518
        $region60: #{tpu_custom_call.1} parent=51 // pred_fallthru
          _
      $region52: #{tpu_custom_call.1} parent=5 // pred_fallthru
        _
    $region6: #{tpu_custom_call.1} parent=1 // loop_footer
      %s20 = sadd.s32 1, %s16
    $region7: #{tpu_custom_call.1} parent=1 // loop_footer_branch
      %15 = sbr.rel target = $region3
    $region8: #{tpu_custom_call.1} parent=1 // loop_exit
      _
    %520 = vsyncpa [#allocation3], 1
    %s521 = scalar_lea.sflag [#allocation3], 1
    %522 = vsyncpa %s521, 1
    %523 = vsyncpa [#allocation5], 1
    %s524 = scalar_lea.sflag [#allocation5], 1
    %525 = vsyncpa %s524, 1

</llo_original>
